<compile_context>
chip_gen: v5e
topology: v5e:2x2
jax: 0.10.0
libtpu: 0.0.40
codegen_flags: <defaults>
</compile_context>

<pallas_src>
import functools

import jax
import jax.numpy as jnp
from jax.experimental import pallas as pl
from jax.experimental.pallas import tpu as pltpu


def _round_up(x, m):
    return ((x + m - 1) // m) * m


def judge_emb_kernel(x_ref, w1_ref, b1_ref, w2_ref, b2_ref, w3_ref, b3_ref, o_ref):
    # X arrives in its original dtype (no standalone astype/pad pass over HBM);
    # cast to the bf16 weight dtype right before the MXU matmul.
    x = x_ref[...].astype(w1_ref.dtype)

    # ---- linear1 + ReLU (bf16 matmul, f32 accumulate / elementwise) ----
    h = jnp.dot(x, w1_ref[...], preferred_element_type=jnp.float32)
    h = jnp.maximum(h + b1_ref[...], 0.0)
    # dropout1: identity (eval semantics)
    # TODO(synk): training-mode dropout (p=0.5) with pltpu PRNG not implemented.

    # ---- linear2 + ReLU ----
    h = jnp.dot(h.astype(w2_ref.dtype), w2_ref[...],
                preferred_element_type=jnp.float32)
    h = jnp.maximum(h + b2_ref[...], 0.0)
    # dropout2: identity (eval semantics)

    # ---- judge_embedding (narrow N = num_judges) ----
    logits = jnp.dot(h.astype(w3_ref.dtype), w3_ref[...],
                     preferred_element_type=jnp.float32)
    logits = logits + b3_ref[...]

    # ---- log_softmax along last axis (dim=1 for 2-D input), f32 throughout ----
    m = jnp.max(logits, axis=-1, keepdims=True)
    shifted = logits - m
    lse = jnp.log(jnp.sum(jnp.exp(shifted), axis=-1, keepdims=True))
    o_ref[...] = (shifted - lse).astype(o_ref.dtype)


def prepare_judge_emb_params(w1, b1, w2, b2, w3, b3, compute_dtype=jnp.bfloat16):
    """One-time parameter conversion, hoisted out of the per-call forward:
    weights -> bf16 (MXU streaming operands), biases -> f32 (f32 accumulate path).
    Weights are stored pre-transposed as [in, out]."""
    return (w1.astype(compute_dtype), b1.astype(jnp.float32),
            w2.astype(compute_dtype), b2.astype(jnp.float32),
            w3.astype(compute_dtype), b3.astype(jnp.float32))


def judge_emb_forward(x, params, *, block_b=4096):
    """x: [B, input_dim] (any float dtype); params from prepare_judge_emb_params."""
    w1c, b1f, w2c, b2f, w3c, b3f = params
    B, input_dim = x.shape
    hidden_dim = w1c.shape[1]
    num_judges = w3c.shape[1]

    # ---- batch tile: large (amortize per-step overhead), multiple of 16 (bf16
    # sublane packing), and aimed at >= 2 blocks so v7x megacore gets both TCs.
    target = _round_up(pl.cdiv(B, 2), 16)
    tb = max(16, min(block_b, target))
    n_blocks = pl.cdiv(B, tb)            # ragged last block handled by the grid

    w_itemsize = jnp.dtype(w1c.dtype).itemsize
    x_itemsize = jnp.dtype(x.dtype).itemsize
    cost = pl.CostEstimate(
        flops=2 * B * (input_dim * hidden_dim
                       + hidden_dim * hidden_dim
                       + hidden_dim * num_judges),
        transcendentals=B * (num_judges + 1),
        bytes_accessed=(B * input_dim * x_itemsize               # X in
                        + B * num_judges * 4                     # log-probs out
                        + (input_dim * hidden_dim
                           + hidden_dim * hidden_dim
                           + hidden_dim * num_judges) * w_itemsize   # weights
                        + (2 * hidden_dim + num_judges) * 4),    # biases
    )

    out = pl.pallas_call(
        judge_emb_kernel,
        out_shape=jax.ShapeDtypeStruct((B, num_judges), jnp.float32),
        grid=(n_blocks,),
        in_specs=[
            pl.BlockSpec((tb, input_dim), lambda i: (i, 0)),      # X tile (pipelined)
            pl.BlockSpec(w1c.shape, lambda i: (0, 0)),            # VMEM-resident
            pl.BlockSpec(b1f.shape, lambda i: (0, 0)),
            pl.BlockSpec(w2c.shape, lambda i: (0, 0)),
            pl.BlockSpec(b2f.shape, lambda i: (0, 0)),
            pl.BlockSpec(w3c.shape, lambda i: (0, 0)),
            pl.BlockSpec(b3f.shape, lambda i: (0, 0)),
        ],
        # Last dim == full array dim (num_judges), so sub-128 lanes are legal;
        # only the real 16 lanes are written back (8x less output traffic).
        out_specs=pl.BlockSpec((tb, num_judges), lambda i: (i, 0)),
        compiler_params=pltpu.CompilerParams(
            dimension_semantics=("parallel",),
            vmem_limit_bytes=32 << 20,     # safe on v7x (64 MiB phys) too
        ),
        cost_estimate=cost,
    )(x, w1c, b1f, w2c, b2f, w3c, b3f)

    return out


def reference_forward(x, w1, b1, w2, b2, w3, b3, compute_dtype=jnp.bfloat16):
    """Same precision recipe as the kernel (bf16 matmul inputs, f32 accumulate)."""
    xc = x.astype(compute_dtype)
    h = jnp.dot(xc, w1.astype(compute_dtype),
                preferred_element_type=jnp.float32) + b1
    h = jnp.maximum(h, 0.0)
    h = jnp.dot(h.astype(compute_dtype), w2.astype(compute_dtype),
                preferred_element_type=jnp.float32) + b2
    h = jnp.maximum(h, 0.0)
    logits = jnp.dot(h.astype(compute_dtype), w3.astype(compute_dtype),
                     preferred_element_type=jnp.float32) + b3
    return jax.nn.log_softmax(logits, axis=1)


if __name__ == "__main__":
    # Small shapes consistent with the module:
    #   input_dim=32, hidden_layer_dim=32, embedding_dim=32 (must equal hidden
    #   for the forward to typecheck), num_judges=16.
    # B=20 is deliberately not a multiple of the tile: the derived tb=16 gives a
    # 2-step grid with a ragged last block (rows 16..19 valid), exercising both
    # the pipelined batch grid and the grid-side (non-materialized) padding.
    B, input_dim, hidden_dim, num_judges = 20, 32, 32, 16
    embedding_dim = hidden_dim

    key = jax.random.PRNGKey(0)
    k_x, k_w1, k_b1, k_w2, k_b2, k_w3, k_b3 = jax.random.split(key, 7)

    x = jax.random.normal(k_x, (B, input_dim), dtype=jnp.float32)

    # weights ~ Normal(0, 0.1) as in init_weights(); stored [in, out] (pre-transposed)
    w1 = 0.1 * jax.random.normal(k_w1, (input_dim, hidden_dim), dtype=jnp.float32)
    w2 = 0.1 * jax.random.normal(k_w2, (hidden_dim, hidden_dim), dtype=jnp.float32)
    w3 = 0.1 * jax.random.normal(k_w3, (embedding_dim, num_judges), dtype=jnp.float32)

    # biases (small deterministic values standing in for PyTorch defaults)
    b1 = 0.01 * jax.random.normal(k_b1, (1, hidden_dim), dtype=jnp.float32)
    b2 = 0.01 * jax.random.normal(k_b2, (1, hidden_dim), dtype=jnp.float32)
    b3 = 0.01 * jax.random.normal(k_b3, (1, num_judges), dtype=jnp.float32)

    # One-time parameter conversion (hoisted out of the per-call path).
    params = prepare_judge_emb_params(w1, b1, w2, b2, w3, b3)

    fwd = jax.jit(functools.partial(judge_emb_forward, block_b=4096))
    out = jax.block_until_ready(fwd(x, params))

    assert out.shape == (B, num_judges)

    # Check against same-precision JAX reference (tight) ...
    ref = reference_forward(x, w1, b1, w2, b2, w3, b3)
    assert jnp.allclose(out, ref, atol=2e-3, rtol=2e-3), "mismatch vs bf16 JAX reference"

    # ... and against the full-f32 reference (loose, precision-trade-off bound).
    ref_f32 = reference_forward(x, w1, b1, w2, b2, w3, b3, compute_dtype=jnp.float32)
    assert jnp.allclose(out, ref_f32, atol=5e-2, rtol=5e-2), "mismatch vs f32 reference"

    # log_softmax rows must normalize to 1.
    assert jnp.allclose(jnp.sum(jnp.exp(out), axis=1), 1.0, atol=1e-3)

    print("KERNEL_OK")
</pallas_src>

<mosaic_0001>
module attributes {stable_mosaic.version = 11 : i64} {
  func.func @judge_emb_kernel(%arg0: i32, %arg1: memref<16x32xf32, #tpu.memory_space<vmem>>, %arg2: memref<32x32xbf16, #tpu.memory_space<vmem>>, %arg3: memref<1x32xf32, #tpu.memory_space<vmem>>, %arg4: memref<32x32xbf16, #tpu.memory_space<vmem>>, %arg5: memref<1x32xf32, #tpu.memory_space<vmem>>, %arg6: memref<32x16xbf16, #tpu.memory_space<vmem>>, %arg7: memref<1x16xf32, #tpu.memory_space<vmem>>, %arg8: memref<16x16xf32, #tpu.memory_space<vmem>>) attributes {dimension_semantics = [#tpu.dimension_semantics<parallel>], iteration_bounds = array<i64: 2>, scalar_prefetch = 0 : i64, scratch_operands = 0 : i64, tpu.core_type = #tpu.core_type<tc>, window_params = [{transform_indices = @transform_0, window_bounds = array<i64: 16, 32>}, {pipeline_mode = #tpu.pipeline_mode<synchronous>, transform_indices = @transform_1, window_bounds = array<i64: 32, 32>}, {pipeline_mode = #tpu.pipeline_mode<synchronous>, transform_indices = @transform_2, window_bounds = array<i64: 1, 32>}, {pipeline_mode = #tpu.pipeline_mode<synchronous>, transform_indices = @transform_3, window_bounds = array<i64: 32, 32>}, {pipeline_mode = #tpu.pipeline_mode<synchronous>, transform_indices = @transform_4, window_bounds = array<i64: 1, 32>}, {pipeline_mode = #tpu.pipeline_mode<synchronous>, transform_indices = @transform_5, window_bounds = array<i64: 32, 16>}, {pipeline_mode = #tpu.pipeline_mode<synchronous>, transform_indices = @transform_6, window_bounds = array<i64: 1, 16>}, {transform_indices = @transform_7, window_bounds = array<i64: 16, 16>}]} {
    %c0 = arith.constant 0 : index
    %c0_0 = arith.constant 0 : index
    %0 = vector.load %arg1[%c0, %c0_0] : memref<16x32xf32, #tpu.memory_space<vmem>>, vector<16x32xf32>
    %1 = arith.truncf %0 : vector<16x32xf32> to vector<16x32xbf16>
    %c0_1 = arith.constant 0 : index
    %c0_2 = arith.constant 0 : index
    %2 = vector.load %arg2[%c0_1, %c0_2] : memref<32x32xbf16, #tpu.memory_space<vmem>>, vector<32x32xbf16>
    %cst = arith.constant dense<0.000000e+00> : vector<16x32xf32>
    %3 = tpu.matmul %1, %2, %cst {dimension_numbers = #tpu.dot_dimension_numbers<[1], [0], [0], [1], [0, 0, 1, 1], [], []>} : vector<16x32xbf16>, vector<32x32xbf16>, vector<16x32xf32> -> vector<16x32xf32>
    %c0_3 = arith.constant 0 : index
    %c0_4 = arith.constant 0 : index
    %4 = vector.load %arg3[%c0_3, %c0_4] : memref<1x32xf32, #tpu.memory_space<vmem>>, vector<1x32xf32>
    %5 = vector.broadcast %4 : vector<1x32xf32> to vector<16x32xf32>
    %6 = arith.addf %3, %5 : vector<16x32xf32>
    %cst_5 = arith.constant 0.000000e+00 : f32
    %7 = vector.broadcast %cst_5 : f32 to vector<16x32xf32>
    %8 = arith.maximumf %6, %7 : vector<16x32xf32>
    %9 = arith.truncf %8 : vector<16x32xf32> to vector<16x32xbf16>
    %c0_6 = arith.constant 0 : index
    %c0_7 = arith.constant 0 : index
    %10 = vector.load %arg4[%c0_6, %c0_7] : memref<32x32xbf16, #tpu.memory_space<vmem>>, vector<32x32xbf16>
    %cst_8 = arith.constant dense<0.000000e+00> : vector<16x32xf32>
    %11 = tpu.matmul %9, %10, %cst_8 {dimension_numbers = #tpu.dot_dimension_numbers<[1], [0], [0], [1], [0, 0, 1, 1], [], []>} : vector<16x32xbf16>, vector<32x32xbf16>, vector<16x32xf32> -> vector<16x32xf32>
    %c0_9 = arith.constant 0 : index
    %c0_10 = arith.constant 0 : index
    %12 = vector.load %arg5[%c0_9, %c0_10] : memref<1x32xf32, #tpu.memory_space<vmem>>, vector<1x32xf32>
    %13 = vector.broadcast %12 : vector<1x32xf32> to vector<16x32xf32>
    %14 = arith.addf %11, %13 : vector<16x32xf32>
    %cst_11 = arith.constant 0.000000e+00 : f32
    %15 = vector.broadcast %cst_11 : f32 to vector<16x32xf32>
    %16 = arith.maximumf %14, %15 : vector<16x32xf32>
    %17 = arith.truncf %16 : vector<16x32xf32> to vector<16x32xbf16>
    %c0_12 = arith.constant 0 : index
    %c0_13 = arith.constant 0 : index
    %18 = vector.load %arg6[%c0_12, %c0_13] : memref<32x16xbf16, #tpu.memory_space<vmem>>, vector<32x16xbf16>
    %cst_14 = arith.constant dense<0.000000e+00> : vector<16x16xf32>
    %19 = tpu.matmul %17, %18, %cst_14 {dimension_numbers = #tpu.dot_dimension_numbers<[1], [0], [0], [1], [0, 0, 1, 1], [], []>} : vector<16x32xbf16>, vector<32x16xbf16>, vector<16x16xf32> -> vector<16x16xf32>
    %c0_15 = arith.constant 0 : index
    %c0_16 = arith.constant 0 : index
    %20 = vector.load %arg7[%c0_15, %c0_16] : memref<1x16xf32, #tpu.memory_space<vmem>>, vector<1x16xf32>
    %21 = vector.broadcast %20 : vector<1x16xf32> to vector<16x16xf32>
    %22 = arith.addf %19, %21 : vector<16x16xf32>
    %cst_17 = arith.constant dense<0xFF800000> : vector<16xf32>
    %23 = vector.multi_reduction <maximumf>, %22, %cst_17 [1] : vector<16x16xf32> to vector<16xf32>
    %24 = vector.shape_cast %23 : vector<16xf32> to vector<16x1xf32>
    %25 = vector.broadcast %24 : vector<16x1xf32> to vector<16x16xf32>
    %26 = arith.subf %22, %25 : vector<16x16xf32>
    %27 = math.exp %26 : vector<16x16xf32>
    %cst_18 = arith.constant dense<0.000000e+00> : vector<16xf32>
    %28 = vector.multi_reduction <add>, %27, %cst_18 [1] : vector<16x16xf32> to vector<16xf32>
    %29 = vector.shape_cast %28 : vector<16xf32> to vector<16x1xf32>
    %30 = math.log %29 : vector<16x1xf32>
    %31 = vector.broadcast %30 : vector<16x1xf32> to vector<16x16xf32>
    %32 = arith.subf %26, %31 : vector<16x16xf32>
    %c0_19 = arith.constant 0 : index
    %c0_20 = arith.constant 0 : index
    %33 = vector.load %arg8[%c0_19, %c0_20] : memref<16x16xf32, #tpu.memory_space<vmem>>, vector<16x16xf32>
    tpu.vector_store %arg8[%c0_19, %c0_20], %32 {strides = array<i32>} : memref<16x16xf32, #tpu.memory_space<vmem>>, vector<16x16xf32>,
    return
  }
  func.func @transform_0(%arg0: i32) -> (i32, i32) {
    %c0_i32 = arith.constant 0 : i32
    %c0_i32_0 = arith.constant 0 : i32
    return %arg0, %c0_i32 : i32, i32
  }
  func.func @transform_1(%arg0: i32) -> (i32, i32) {
    %c0_i32 = arith.constant 0 : i32
    %c0_i32_0 = arith.constant 0 : i32
    %c0_i32_1 = arith.constant 0 : i32
    return %c0_i32, %c0_i32_0 : i32, i32
  }
  func.func @transform_2(%arg0: i32) -> (i32, i32) {
    %c0_i32 = arith.constant 0 : i32
    %c0_i32_0 = arith.constant 0 : i32
    %c0_i32_1 = arith.constant 0 : i32
    return %c0_i32, %c0_i32_0 : i32, i32
  }
  func.func @transform_3(%arg0: i32) -> (i32, i32) {
    %c0_i32 = arith.constant 0 : i32
    %c0_i32_0 = arith.constant 0 : i32
    %c0_i32_1 = arith.constant 0 : i32
    return %c0_i32, %c0_i32_0 : i32, i32
  }
  func.func @transform_4(%arg0: i32) -> (i32, i32) {
    %c0_i32 = arith.constant 0 : i32
    %c0_i32_0 = arith.constant 0 : i32
    %c0_i32_1 = arith.constant 0 : i32
    return %c0_i32, %c0_i32_0 : i32, i32
  }
  func.func @transform_5(%arg0: i32) -> (i32, i32) {
    %c0_i32 = arith.constant 0 : i32
    %c0_i32_0 = arith.constant 0 : i32
    %c0_i32_1 = arith.constant 0 : i32
    return %c0_i32, %c0_i32_0 : i32, i32
  }
  func.func @transform_6(%arg0: i32) -> (i32, i32) {
    %c0_i32 = arith.constant 0 : i32
    %c0_i32_0 = arith.constant 0 : i32
    %c0_i32_1 = arith.constant 0 : i32
    return %c0_i32, %c0_i32_0 : i32, i32
  }
  func.func @transform_7(%arg0: i32) -> (i32, i32) {
    %c0_i32 = arith.constant 0 : i32
    %c0_i32_0 = arith.constant 0 : i32
    return %arg0, %c0_i32 : i32, i32
  }
}

</mosaic_0001>

<llo_original>
// kernel: judge_emb_forward.1
$region0: #{judge_emb_forward.1}
  #allocation0 [shape = 'u32[]', space=smem, size = 0x4, offset = 0x4, fixed_abs, tag = 'smem constant byte address 0x4 - core index']
  #allocation1 [shape = 'u32[72,128]{1,0:T(1,128)}', space=vmem, size = 0x9000, scoped, tag = 'internal scratch']
  %s0 = inlined_call_operand.vmem [shape: f32[20,32], index: 0, kind: input, shape index: {}]
  %s1 = inlined_call_operand.hbm [shape: bf16[32,32], index: 1, kind: input, shape index: {}]
  %s2 = inlined_call_operand.vmem [shape: f32[1,32], index: 2, kind: input, shape index: {}]
  %s3 = inlined_call_operand.hbm [shape: bf16[32,32], index: 3, kind: input, shape index: {}]
  %s4 = inlined_call_operand.vmem [shape: f32[1,32], index: 4, kind: input, shape index: {}]
  %s5 = inlined_call_operand.vmem [shape: bf16[32,16], index: 5, kind: input, shape index: {}]
  %s6 = inlined_call_operand.vmem [shape: f32[1,16], index: 6, kind: input, shape index: {}]
  %s7 = inlined_call_operand.vmem [shape: f32[20,16], index: 7, kind: output, shape index: {}]
  %s8 = sld [smem:[#allocation0]]
  $region117: #{judge_emb_forward.1} parent=0
    _
  %s10 = ssub.s32 1, %s8
  %s11 = scalar_select 0, %s10, %s8
  $region1: #{judge_emb_forward.1} parent=0
    #allocation2 [shape = 'u8[8192]{0}', space=vmem, size = 0x2000, scoped, tag = 'input window, operand 1, single buffered']
    #allocation3 [shape = 's32[2]{0}', space=sflag, size = 0x8, scoped, tag = 'scoped memory for judge_emb_forward.1']
    #allocation4 [shape = 'u8[8192]{0}', space=vmem, size = 0x2000, scoped, tag = 'input window, operand 3, single buffered']
    #allocation5 [shape = 's32[1]{0}', space=sflag, size = 0x4, scoped, tag = 'scoped memory for judge_emb_forward.1']
    #allocation6 [shape = 'u8[16384]{0}', space=vmem, size = 0x4000, scoped, tag = 'output window, operand 0']
    %12 = vsyncpa [#allocation3], 0
    %13 = vsyncpa [#allocation5], 0
    loop: start=0, step=1, limit=4
    $region2: #{judge_emb_forward.1} parent=1 // loop_pre_header
      _
    $region3: #{judge_emb_forward.1} parent=1 // loop_header
      %s15 = sphi 0, %s19
      %p16 = scmp.ge.s32.totalorder %s15, 4
      %s25 = sphi 0, %s27
      %s28 = sphi 0, %s25
      %s29 = sphi 0, %s28
      %s45 = sphi 0, %s29
      %s49 = sphi 0, %s49
      %s51 = sphi 0, %s49
      %s52 = sphi 0, %s51
      %s66 = sphi 0, %s52
      %s70 = sphi 0, %s70
      %s72 = sphi 0, %s70
      %s73 = sphi 0, %s72
      %s87 = sphi 0, %s73
      %s91 = sphi 0, %s91
      %s93 = sphi 0, %s91
      %s94 = sphi 0, %s93
      %s108 = sphi 0, %s94
      %s112 = sphi 0, %s112
      %s114 = sphi 0, %s112
      %s115 = sphi 0, %s114
      %s129 = sphi 0, %s115
      %s133 = sphi 0, %s133
      %s135 = sphi 0, %s133
      %s136 = sphi 0, %s135
      %s150 = sphi 0, %s136
      %s154 = sphi 0, %s154
      %s156 = sphi 0, %s154
      %s157 = sphi 0, %s156
      %s171 = sphi 0, %s157
      %s177 = sphi 0, %s179
      %s180 = sphi 0, %s177
      %s181 = sphi 0, %s180
      %s197 = sphi 0, %s181
    $region4: #{judge_emb_forward.1} parent=1 // loop_header_branch
      %18 = sbr.rel (%p16) target = $region8
    $region5: #{judge_emb_forward.1} parent=1 // loop_body
      %s20 = ssub.s32 %s15, 1
      %s21 = ssub.s32 %s15, 2
      %s22 = sadd.s32 %s15, 1
      %s23 = ssub.s32 %s15, %s22
      %p24 = scmp.eq.s32.totalorder %s23, 0
      %s26 = sadd.s32 %s25, 1
      %s27 = scalar_select %p24, %s25, %s26
      %p30 = pneg %p24
      %p31 = scmp.eq.s32.totalorder %s15, 1
      %p32 = por %p30, %p31
      %p33 = scmp.ne.s32.totalorder %s25, %s28
      %p34 = scmp.eq.s32.totalorder %s15, 0
      %p35 = por %p33, %p34
      %p36 = scmp.ne.s32.totalorder %s25, %s28
      %p37 = scmp.eq.s32.totalorder %s20, 1
      %p38 = por %p36, %p37
      %p39 = scmp.ne.s32.totalorder %s28, %s29
      %p40 = scmp.eq.s32.totalorder %s20, 0
      %p41 = por %p39, %p40
      %p42 = scmp.ne.s32.totalorder %s28, %s29
      %p43 = scmp.eq.s32.totalorder %s21, 1
      %p44 = por %p42, %p43
      %p46 = scmp.ne.s32.totalorder %s29, %s45
      %p47 = scmp.eq.s32.totalorder %s21, 0
      %p48 = por %p46, %p47
      %s50 = sadd.s32 %s49, 1
      %p53 = scmp.eq.s32.totalorder %s15, 1
      %p54 = scmp.ne.s32.totalorder %s49, %s51
      %p55 = scmp.eq.s32.totalorder %s15, 0
      %p56 = por %p54, %p55
      %p57 = scmp.ne.s32.totalorder %s49, %s51
      %p58 = scmp.eq.s32.totalorder %s20, 1
      %p59 = por %p57, %p58
      %p60 = scmp.ne.s32.totalorder %s51, %s52
      %p61 = scmp.eq.s32.totalorder %s20, 0
      %p62 = por %p60, %p61
      %p63 = scmp.ne.s32.totalorder %s51, %s52
      %p64 = scmp.eq.s32.totalorder %s21, 1
      %p65 = por %p63, %p64
      %p67 = scmp.ne.s32.totalorder %s52, %s66
      %p68 = scmp.eq.s32.totalorder %s21, 0
      %p69 = por %p67, %p68
      %s71 = sadd.s32 %s70, 1
      %p74 = scmp.eq.s32.totalorder %s15, 1
      %p75 = scmp.ne.s32.totalorder %s70, %s72
      %p76 = scmp.eq.s32.totalorder %s15, 0
      %p77 = por %p75, %p76
      %p78 = scmp.ne.s32.totalorder %s70, %s72
      %p79 = scmp.eq.s32.totalorder %s20, 1
      %p80 = por %p78, %p79
      %p81 = scmp.ne.s32.totalorder %s72, %s73
      %p82 = scmp.eq.s32.totalorder %s20, 0
      %p83 = por %p81, %p82
      %p84 = scmp.ne.s32.totalorder %s72, %s73
      %p85 = scmp.eq.s32.totalorder %s21, 1
      %p86 = por %p84, %p85
      %p88 = scmp.ne.s32.totalorder %s73, %s87
      %p89 = scmp.eq.s32.totalorder %s21, 0
      %p90 = por %p88, %p89
      %s92 = sadd.s32 %s91, 1
      %p95 = scmp.eq.s32.totalorder %s15, 1
      %p96 = scmp.ne.s32.totalorder %s91, %s93
      %p97 = scmp.eq.s32.totalorder %s15, 0
      %p98 = por %p96, %p97
      %p99 = scmp.ne.s32.totalorder %s91, %s93
      %p100 = scmp.eq.s32.totalorder %s20, 1
      %p101 = por %p99, %p100
      %p102 = scmp.ne.s32.totalorder %s93, %s94
      %p103 = scmp.eq.s32.totalorder %s20, 0
      %p104 = por %p102, %p103
      %p105 = scmp.ne.s32.totalorder %s93, %s94
      %p106 = scmp.eq.s32.totalorder %s21, 1
      %p107 = por %p105, %p106
      %p109 = scmp.ne.s32.totalorder %s94, %s108
      %p110 = scmp.eq.s32.totalorder %s21, 0
      %p111 = por %p109, %p110
      %s113 = sadd.s32 %s112, 1
      %p116 = scmp.eq.s32.totalorder %s15, 1
      %p117 = scmp.ne.s32.totalorder %s112, %s114
      %p118 = scmp.eq.s32.totalorder %s15, 0
      %p119 = por %p117, %p118
      %p120 = scmp.ne.s32.totalorder %s112, %s114
      %p121 = scmp.eq.s32.totalorder %s20, 1
      %p122 = por %p120, %p121
      %p123 = scmp.ne.s32.totalorder %s114, %s115
      %p124 = scmp.eq.s32.totalorder %s20, 0
      %p125 = por %p123, %p124
      %p126 = scmp.ne.s32.totalorder %s114, %s115
      %p127 = scmp.eq.s32.totalorder %s21, 1
      %p128 = por %p126, %p127
      %p130 = scmp.ne.s32.totalorder %s115, %s129
      %p131 = scmp.eq.s32.totalorder %s21, 0
      %p132 = por %p130, %p131
      %s134 = sadd.s32 %s133, 1
      %p137 = scmp.eq.s32.totalorder %s15, 1
      %p138 = scmp.ne.s32.totalorder %s133, %s135
      %p139 = scmp.eq.s32.totalorder %s15, 0
      %p140 = por %p138, %p139
      %p141 = scmp.ne.s32.totalorder %s133, %s135
      %p142 = scmp.eq.s32.totalorder %s20, 1
      %p143 = por %p141, %p142
      %p144 = scmp.ne.s32.totalorder %s135, %s136
      %p145 = scmp.eq.s32.totalorder %s20, 0
      %p146 = por %p144, %p145
      %p147 = scmp.ne.s32.totalorder %s135, %s136
      %p148 = scmp.eq.s32.totalorder %s21, 1
      %p149 = por %p147, %p148
      %p151 = scmp.ne.s32.totalorder %s136, %s150
      %p152 = scmp.eq.s32.totalorder %s21, 0
      %p153 = por %p151, %p152
      %s155 = sadd.s32 %s154, 1
      %p158 = scmp.eq.s32.totalorder %s15, 1
      %p159 = scmp.ne.s32.totalorder %s154, %s156
      %p160 = scmp.eq.s32.totalorder %s15, 0
      %p161 = por %p159, %p160
      %p162 = scmp.ne.s32.totalorder %s154, %s156
      %p163 = scmp.eq.s32.totalorder %s20, 1
      %p164 = por %p162, %p163
      %p165 = scmp.ne.s32.totalorder %s156, %s157
      %p166 = scmp.eq.s32.totalorder %s20, 0
      %p167 = por %p165, %p166
      %p168 = scmp.ne.s32.totalorder %s156, %s157
      %p169 = scmp.eq.s32.totalorder %s21, 1
      %p170 = por %p168, %p169
      %p172 = scmp.ne.s32.totalorder %s157, %s171
      %p173 = scmp.eq.s32.totalorder %s21, 0
      %p174 = por %p172, %p173
      %s175 = ssub.s32 %s15, %s22
      %p176 = scmp.eq.s32.totalorder %s175, 0
      %s178 = sadd.s32 %s177, 1
      %s179 = scalar_select %p176, %s177, %s178
      %p182 = pneg %p176
      %p183 = scmp.eq.s32.totalorder %s15, 1
      %p184 = por %p182, %p183
      %p185 = scmp.ne.s32.totalorder %s177, %s180
      %p186 = scmp.eq.s32.totalorder %s15, 0
      %p187 = por %p185, %p186
      %p188 = scmp.ne.s32.totalorder %s177, %s180
      %p189 = scmp.eq.s32.totalorder %s20, 1
      %p190 = por %p188, %p189
      %p191 = scmp.ne.s32.totalorder %s180, %s181
      %p192 = scmp.eq.s32.totalorder %s20, 0
      %p193 = por %p191, %p192
      %p194 = scmp.ne.s32.totalorder %s180, %s181
      %p195 = scmp.eq.s32.totalorder %s21, 1
      %p196 = por %p194, %p195
      %p198 = scmp.ne.s32.totalorder %s181, %s197
      %p199 = scmp.eq.s32.totalorder %s21, 0
      %p200 = por %p198, %p199
      %p201 = scmp.le.s32.totalorder 1, %s15
      %p202 = scmp.lt.s32.totalorder %s15, 3
      %p203 = pnand %p201, %p202
      %p204 = pneg %p203
      // Predicated region
      $region9: #{judge_emb_forward.1} parent=5 // pred_check
        _
      $region10: #{judge_emb_forward.1} parent=5 // pred_check_branch
        %206 = sbr.rel (%p203) target = $region12
      $region11: #{judge_emb_forward.1} parent=5 // pred_region
        %s207 = ssub.s32 %s15, 1
        // Predicated region
        $region13: #{judge_emb_forward.1} parent=11 // pred_check
          %p208 = pneg %p62
        $region14: #{judge_emb_forward.1} parent=11 // pred_check_branch
          %210 = sbr.rel (%p208) target = $region16
        $region15: #{judge_emb_forward.1} parent=11 // pred_region
          %212 = vsyncadd [#allocation3], 0
          %s213 = sshll.u32 %s1, 4
          %s214 = int_to_ptr.hbm [resolvable:$true] %s213
          %s215 = sshll.u32 [#allocation2], 4
          %s216 = int_to_ptr.vmem [resolvable:$true] %s215
          %221 = dma.hbm_to_vmem [thread:$0]  %s214, 256, %s216, [#allocation3], 64, 64, 4
        $region16: #{judge_emb_forward.1} parent=11 // pred_fallthru
          _
        // Predicated region
        $region17: #{judge_emb_forward.1} parent=11 // pred_check
          %p222 = pneg %p83
        $region18: #{judge_emb_forward.1} parent=11 // pred_check_branch
          %224 = sbr.rel (%p222) target = $region20
        $region19: #{judge_emb_forward.1} parent=11 // pred_region
          _
        $region20: #{judge_emb_forward.1} parent=11 // pred_fallthru
          _
        // Predicated region
        $region21: #{judge_emb_forward.1} parent=11 // pred_check
          %p225 = pneg %p104
        $region22: #{judge_emb_forward.1} parent=11 // pred_check_branch
          %227 = sbr.rel (%p225) target = $region24
        $region23: #{judge_emb_forward.1} parent=11 // pred_region
          %229 = vsyncadd [#allocation5], 0
          %s230 = sshll.u32 %s3, 4
          %s231 = int_to_ptr.hbm [resolvable:$true] %s230
          %s232 = sshll.u32 [#allocation4], 4
          %s233 = int_to_ptr.vmem [resolvable:$true] %s232
          %238 = dma.hbm_to_vmem [thread:$0]  %s231, 256, %s233, [#allocation5], 64, 64, 4
        $region24: #{judge_emb_forward.1} parent=11 // pred_fallthru
          _
        // Predicated region
        $region25: #{judge_emb_forward.1} parent=11 // pred_check
          %p239 = pneg %p125
        $region26: #{judge_emb_forward.1} parent=11 // pred_check_branch
          %241 = sbr.rel (%p239) target = $region28
        $region27: #{judge_emb_forward.1} parent=11 // pred_region
          _
        $region28: #{judge_emb_forward.1} parent=11 // pred_fallthru
          _
        // Predicated region
        $region29: #{judge_emb_forward.1} parent=11 // pred_check
          %p242 = pneg %p146
        $region30: #{judge_emb_forward.1} parent=11 // pred_check_branch
          %244 = sbr.rel (%p242) target = $region32
        $region31: #{judge_emb_forward.1} parent=11 // pred_region
          _
        $region32: #{judge_emb_forward.1} parent=11 // pred_fallthru
          _
        // Predicated region
        $region33: #{judge_emb_forward.1} parent=11 // pred_check
          %p245 = pneg %p167
        $region34: #{judge_emb_forward.1} parent=11 // pred_check_branch
          %247 = sbr.rel (%p245) target = $region36
        $region35: #{judge_emb_forward.1} parent=11 // pred_region
          _
        $region36: #{judge_emb_forward.1} parent=11 // pred_fallthru
          _
      $region12: #{judge_emb_forward.1} parent=5 // pred_fallthru
        _
      %p248 = scmp.lt.s32.totalorder %s15, 2
      // Predicated region
      $region37: #{judge_emb_forward.1} parent=5 // pred_check
        %p249 = pneg %p248
      $region38: #{judge_emb_forward.1} parent=5 // pred_check_branch
        %251 = sbr.rel (%p249) target = $region40
      $region39: #{judge_emb_forward.1} parent=5 // pred_region
        // Predicated region
        $region41: #{judge_emb_forward.1} parent=39 // pred_check
          %p252 = pneg %p35
        $region42: #{judge_emb_forward.1} parent=39 // pred_check_branch
          %254 = sbr.rel (%p252) target = $region44
        $region43: #{judge_emb_forward.1} parent=39 // pred_region
          %s255 = smul.u32 2, %s15
          %s256 = ssub.s32 3, %s255
          %p257 = scmp.lt.s32.totalorder %s256, 2
          %s258 = scalar_select %p257, %s256, 2
          %s259 = smul.u32 8, %s258
          %p260 = scmp.lt.s32.totalorder %s255, 2
          %s261 = scalar_select %p260, %s255, 2
          %s262 = smul.addr %s261, 8
          %s263 = scalar_lea.vmem %s0, %s262
          %s264 = smul.u32 2, %s15
          %s265 = ssub.s32 3, %s264
          %p266 = scmp.lt.s32.totalorder %s265, 2
          %s267 = scalar_select %p266, %s265, 2
          %s268 = smul.u32 8, %s267
        $region44: #{judge_emb_forward.1} parent=39 // pred_fallthru
          _
      $region40: #{judge_emb_forward.1} parent=5 // pred_fallthru
        _
      %p269 = scmp.le.s32.totalorder 1, %s15
      %p270 = scmp.lt.s32.totalorder %s15, 3
      %p271 = pnand %p269, %p270
      %p272 = pneg %p271
      // Predicated region
      $region45: #{judge_emb_forward.1} parent=5 // pred_check
        _
      $region46: #{judge_emb_forward.1} parent=5 // pred_check_branch
        %274 = sbr.rel (%p271) target = $region48
      $region47: #{judge_emb_forward.1} parent=5 // pred_region
        %s275 = ssub.s32 %s15, 1
        // Predicated region
        $region49: #{judge_emb_forward.1} parent=47 // pred_check
          %p276 = pneg %p62
        $region50: #{judge_emb_forward.1} parent=47 // pred_check_branch
          %278 = sbr.rel (%p276) target = $region52
        $region51: #{judge_emb_forward.1} parent=47 // pred_region
          %280 = dma.done [#allocation3], 256
        $region52: #{judge_emb_forward.1} parent=47 // pred_fallthru
          _
        // Predicated region
        $region53: #{judge_emb_forward.1} parent=47 // pred_check
          %p281 = pneg %p104
        $region54: #{judge_emb_forward.1} parent=47 // pred_check_branch
          %283 = sbr.rel (%p281) target = $region56
        $region55: #{judge_emb_forward.1} parent=47 // pred_region
          %285 = dma.done [#allocation5], 256
        $region56: #{judge_emb_forward.1} parent=47 // pred_fallthru
          _
        %s286 = smul.u32 2, %s20
        %s287 = ssub.s32 3, %s286
        %p288 = scmp.lt.s32.totalorder %s287, 2
        %s289 = scalar_select %p288, %s287, 2
        %s290 = smul.u32 8, %s289
        %p291 = scmp.lt.s32.totalorder %s286, 2
        %s292 = scalar_select %p291, %s286, 2
        %s293 = smul.addr %s292, 8
        %s294 = scalar_lea.vmem %s0, %s293
        %p295 = pneg %p41
        %p296 = pneg %p38
        %p297 = pneg %p62
        %p298 = pneg %p59
        %p299 = pneg %p83
        %p300 = pneg %p80
        %p301 = pneg %p104
        %p302 = pneg %p101
        %p303 = pneg %p125
        %p304 = pneg %p122
        %p305 = pneg %p146
        %p306 = pneg %p143
        %p307 = pneg %p167
        %p308 = pneg %p164
        %p309 = pneg %p193
        %p310 = pneg %p190
        %s311 = sand.u32 %s180, 1
        %s312 = sand.u32 %s180, 1
        %s313 = smul.addr %s312, 16
        %s314 = scalar_lea.vmem [#allocation6], %s313
        %s315 = smul.u32 2, %s20
        %s316 = ssub.s32 3, %s315
        %p317 = scmp.lt.s32.totalorder %s316, 2
        %s318 = scalar_select %p317, %s316, 2
        %s319 = smul.u32 8, %s318
        %p320 = scmp.lt.s32.totalorder %s315, 2
        %s321 = scalar_select %p320, %s315, 2
        %s322 = smul.addr %s321, 8
        %s323 = scalar_lea.vmem %s0, %s322
        %s324 = smul.u32 2, %s20
        %s325 = ssub.s32 3, %s324
        %p326 = scmp.lt.s32.totalorder %s325, 2
        %s327 = scalar_select %p326, %s325, 2
        %s328 = smul.u32 8, %s327
        %s329 = smul.u32 2, %s20
        %s330 = ssub.s32 3, %s329
        %p331 = scmp.lt.s32.totalorder %s330, 2
        %s332 = scalar_select %p331, %s330, 2
        %s333 = smul.u32 8, %s332
        %v335 = vld [vmem:[%s323] sm:$0xff]
        %v336 = vld [vmem:[%s323 + $0x8] sm:$0xff]
        %v337 = vpack.c.bf16 %v336, %v335
        %v338 = vld [vmem:[#allocation2] sm:$0xf]
        %v339 = vld [vmem:[#allocation2 + $0x4] sm:$0xf]
        %v340 = vld [vmem:[#allocation2 + $0x8] sm:$0xf]
        %v341 = vld [vmem:[#allocation2 + $0xc] sm:$0xf]
        %v342 = vld [vmem:[%s2] sm:$0x1]
        %v344 = vperm.slane %v342, 0
        %v350 = vunpack.c.l.b16 %v338
        %v351 = vunpack.c.l.b16 %v339
        %v352 = vunpack.c.l.b16 %v340
        %v353 = vunpack.c.l.b16 %v341
        %v354 = vpack.c.b16 %v351, %v350
        %v355 = vpack.c.b16 %v353, %v352
        %vm358 = vcmask 261120
        %v360 = vsel %vm358, %v337, 0
        %362 = vmatpush.bf16.msra.mxu0 0
        %363 = vmatpush.bf16.msra.mxu0 0
        %364 = vmatpush.bf16.msra.mxu0 0
        %365 = vmatpush.bf16.msra.mxu0 0
        %366 = vmatpush.bf16.msra.mxu0 0
        %367 = vmatpush.bf16.msra.mxu0 0
        %368 = vmatpush.bf16.msra.mxu0 %v355
        %369 = vmatpush.bf16.msra.mxu0 %v354
        %370 = vmatmul.bf16.gmra.mxu0 %v360
        %v371 = vpop.f32.mrf.mxu0
        %v372 = vadd.f32 %v344, %v371
        %v373 = vpop.f32.mrf.mxu0
        %v374 = vadd.f32 %v344, %v373
        %375 = vdwg.mxu0
        %v376 = vmax.f32 %v372, 0.0
        %v377 = vmax.f32 %v374, 0.0
        %v378 = vpack.c.bf16 %v377, %v376
        %v379 = vld [vmem:[#allocation4] sm:$0xf]
        %v380 = vld [vmem:[#allocation4 + $0x4] sm:$0xf]
        %v381 = vld [vmem:[#allocation4 + $0x8] sm:$0xf]
        %v382 = vld [vmem:[#allocation4 + $0xc] sm:$0xf]
        %v383 = vld [vmem:[%s4] sm:$0x1]
        %v385 = vperm.slane %v383, 0
        %v391 = vunpack.c.l.b16 %v379
        %v392 = vunpack.c.l.b16 %v380
        %v393 = vunpack.c.l.b16 %v381
        %v394 = vunpack.c.l.b16 %v382
        %v395 = vpack.c.b16 %v392, %v391
        %v396 = vpack.c.b16 %v394, %v393
        %v400 = vsel %vm358, %v378, 0
        %402 = vmatpush.bf16.msra.mxu0 0
        %403 = vmatpush.bf16.msra.mxu0 0
        %404 = vmatpush.bf16.msra.mxu0 0
        %405 = vmatpush.bf16.msra.mxu0 0
        %406 = vmatpush.bf16.msra.mxu0 0
        %407 = vmatpush.bf16.msra.mxu0 0
        %408 = vmatpush.bf16.msra.mxu0 %v396
        %409 = vmatpush.bf16.msra.mxu0 %v395
        %410 = vmatmul.bf16.gmra.mxu0 %v400
        %v411 = vpop.f32.mrf.mxu0
        %v412 = vadd.f32 %v385, %v411
        %v413 = vpop.f32.mrf.mxu0
        %v414 = vadd.f32 %v385, %v413
        %415 = vdwg.mxu0
        %v416 = vmax.f32 %v412, 0.0
        %v417 = vmax.f32 %v414, 0.0
        %v418 = vpack.c.bf16 %v417, %v416
        %v419 = vld [vmem:[%s5] sm:$0xf]
        %v420 = vld [vmem:[%s5 + $0x4] sm:$0xf]
        %v421 = vld [vmem:[%s5 + $0x8] sm:$0xf]
        %v422 = vld [vmem:[%s5 + $0xc] sm:$0xf]
        %v423 = vld [vmem:[%s6] sm:$0x1]
        %v425 = vperm.slane %v423, 0
        %v431 = vunpack.c.l.b16 %v419
        %v432 = vunpack.c.l.b16 %v420
        %v433 = vunpack.c.l.b16 %v421
        %v434 = vunpack.c.l.b16 %v422
        %v435 = vpack.c.b16 %v432, %v431
        %v436 = vpack.c.b16 %v434, %v433
        %v440 = vsel %vm358, %v418, 0
        %442 = vmatpush.bf16.msra.mxu0 0
        %443 = vmatpush.bf16.msra.mxu0 0
        %444 = vmatpush.bf16.msra.mxu0 0
        %445 = vmatpush.bf16.msra.mxu0 0
        %446 = vmatpush.bf16.msra.mxu0 0
        %447 = vmatpush.bf16.msra.mxu0 0
        %448 = vmatpush.bf16.msra.mxu0 %v436
        %449 = vmatpush.bf16.msra.mxu0 %v435
        %450 = vmatmul.bf16.gmra.mxu0 %v440
        %v451 = vpop.f32.mrf.mxu0
        %v452 = vadd.f32 %v425, %v451
        %v453 = vpop.f32.mrf.mxu0
        %v454 = vadd.f32 %v425, %v453
        %455 = vdwg.mxu0
        %vm456 = vcmask 130048
        %v457 = vsel %vm456, %v452, -inf
        %458 = vmax.xlane.f32.xlu0 %v457
        %v459 = vpop.xlane.xlu0 %458
        %v460 = vsel %vm456, %v454, -inf
        %461 = vmax.xlane.f32.xlu0 %v460
        %v462 = vpop.xlane.xlu0 %461
        %v463 = vsub.f32 %v452, %v459
        %v464 = vsub.f32 %v454, %v462
        %v465 = vmul.f32 %v463, 1.442695
        %v466 = vpow.pop %v465
        %v467 = vmul.f32 %v464, 1.442695
        %v468 = vpow.pop %v467
        %v469 = vsel %vm456, %v466, 0.0
        %470 = vadd.xlane.f32.xlu0 %v469
        %v471 = vpop.xlane.xlu0 %470
        %v472 = vsel %vm456, %v468, 0.0
        %473 = vadd.xlane.f32.xlu0 %v472
        %v474 = vpop.xlane.xlu0 %473
        %v475 = vlog2.pop %v471
        %v476 = vmul.f32 %v475, 0.6931472
        %v477 = vlog2.pop %v474
        %v478 = vmul.f32 %v477, 0.6931472
        %v479 = vsub.f32 %v463, %v476
        %v480 = vsub.f32 %v464, %v478
        %481 = vst.msk [vmem:[%s314] sm:$0xff] %vm456, %v479
        %482 = vst.msk [vmem:[%s314 + $0x8] sm:$0xff] %vm456, %v480
        %s483 = sand.u32 %s180, 1
        %s484 = sand.u32 %s180, 1
        %s485 = smul.addr %s484, 16
        %s486 = scalar_lea.vmem [#allocation6], %s485
        // Predicated region
        $region57: #{judge_emb_forward.1} parent=47 // pred_check
          %p487 = pneg %p190
        $region58: #{judge_emb_forward.1} parent=47 // pred_check_branch
          %489 = sbr.rel (%p487) target = $region60
        $region59: #{judge_emb_forward.1} parent=47 // pred_region
          %s490 = smul.u32 2, %s20
          %s491 = ssub.s32 3, %s490
          %p492 = scmp.lt.s32.totalorder %s491, 2
          %s493 = scalar_select %p492, %s491, 2
          %s494 = smul.u32 8, %s493
          %p495 = scmp.ne.s32.totalorder 0, %s494
          %s496 = smul.addr %s490, 8
          %s497 = scalar_lea.vmem %s7, %s496
          // Predicated region
          $region61: #{judge_emb_forward.1} parent=59 // pred_check
            %p498 = pneg %p495
          $region62: #{judge_emb_forward.1} parent=59 // pred_check_branch
            %500 = sbr.rel (%p498) target = $region64
          $region63: #{judge_emb_forward.1} parent=59 // pred_region
            // Predicated region
            $region65: #{judge_emb_forward.1} parent=63 // pred_check
              _
            $region66: #{judge_emb_forward.1} parent=63 // pred_check_branch
              %502 = sbr.rel (0) target = $region68
            $region67: #{judge_emb_forward.1} parent=63 // pred_region
              // Predicated region
              $region87: #{judge_emb_forward.1} parent=67 // pred_check
                _
              $region88: #{judge_emb_forward.1} parent=67 // pred_check_branch
                %554 = sbr.rel (0) target = $region90
              $region89: #{judge_emb_forward.1} parent=67 // pred_region
                %s555 = sshrl.u32 %s493, 1
                // While loop
                $region91: #{judge_emb_forward.1} parent=89 // loop_pre_header
                  _
                $region92: #{judge_emb_forward.1} parent=89 // loop_header
                  %s557 = sphi 0, %s559
                  %p558 = scmp.ge.s32.totalorder %s557, %s555
                  %s562 = sphi 0, %s571
                  %s563 = sphi %s486, %s574
                  %s564 = sphi %s497, %s575
                $region93: #{judge_emb_forward.1} parent=89 // loop_header_branch
                  %561 = sbr.rel (%p558) target = $region97
                $region94: #{judge_emb_forward.1} parent=89 // loop_body
                  %v565 = vld [vmem:[%s563] sm:$0xff]
                  %566 = vst [vmem:[%s564] sm:$0xff] %v565
                  %v567 = vld [vmem:[%s563 + $0x8] sm:$0xff]
                  %568 = vst [vmem:[%s564 + $0x8] sm:$0xff] %v567
                  %s569 = sadd.s32 1, %s562
                  %p570 = scmp.ge.s32.totalorder %s569, %s555
                  %s571 = scalar_select %p570, 0, %s569
                  %s572 = smul.u32 %s571, 16
                  %s573 = smul.u32 %s571, 16
                  %s574 = scalar_lea.vmem %s486, %s572 [#allocation6]
                  %s575 = scalar_lea.vmem %s497, %s573
                $region95: #{judge_emb_forward.1} parent=89 // loop_footer
                  %s559 = sadd.s32 %s557, 1
                $region96: #{judge_emb_forward.1} parent=89 // loop_footer_branch
                  %556 = sbr.rel target = $region92
                $region97: #{judge_emb_forward.1} parent=89 // loop_exit
                  _
                %s576 = sshrl.u32 %s493, 1
                %s577 = sand.u32 %s493, 1
                %s578 = smul.u32 %s576, 2
                %s579 = smul.u32 8, %s578
                %s580 = scalar_lea.vmem %s486, %s579 [#allocation6]
                %s581 = smul.u32 8, %s578
                %s582 = scalar_lea.vmem %s497, %s581
                // While loop
                $region98: #{judge_emb_forward.1} parent=89 // loop_pre_header
                  _
                $region99: #{judge_emb_forward.1} parent=89 // loop_header
                  %s584 = sphi 0, %s586
                  %p585 = scmp.ge.s32.totalorder %s584, %s577
                  %s589 = sphi 0, %s596
                  %s590 = sphi %s580, %s599
                  %s591 = sphi %s582, %s600
                $region100: #{judge_emb_forward.1} parent=89 // loop_header_branch
                  %588 = sbr.rel (%p585) target = $region104
                $region101: #{judge_emb_forward.1} parent=89 // loop_body
                  %v592 = vld [vmem:[%s590] sm:$0xff]
                  %593 = vst [vmem:[%s591] sm:$0xff] %v592
                  %s594 = sadd.s32 1, %s589
                  %p595 = scmp.ge.s32.totalorder %s594, %s577
                  %s596 = scalar_select %p595, 0, %s594
                  %s597 = smul.u32 %s596, 8
                  %s598 = smul.u32 %s596, 8
                  %s599 = scalar_lea.vmem %s580, %s597 [#allocation6]
                  %s600 = scalar_lea.vmem %s582, %s598
                $region102: #{judge_emb_forward.1} parent=89 // loop_footer
                  %s586 = sadd.s32 %s584, 1
                $region103: #{judge_emb_forward.1} parent=89 // loop_footer_branch
                  %583 = sbr.rel target = $region99
                $region104: #{judge_emb_forward.1} parent=89 // loop_exit
                  _
              $region90: #{judge_emb_forward.1} parent=67 // pred_fallthru
                _
              // Predicated region
              $region105: #{judge_emb_forward.1} parent=67 // pred_check
                _
              $region106: #{judge_emb_forward.1} parent=67 // pred_check_branch
                %602 = sbr.rel target = $region108
              $region107: #{judge_emb_forward.1} parent=67 // pred_region
                _
              $region108: #{judge_emb_forward.1} parent=67 // pred_fallthru
                _
            $region68: #{judge_emb_forward.1} parent=63 // pred_fallthru
              _
            // Predicated region
            $region69: #{judge_emb_forward.1} parent=63 // pred_check
              _
            $region70: #{judge_emb_forward.1} parent=63 // pred_check_branch
              %504 = sbr.rel target = $region72
            $region71: #{judge_emb_forward.1} parent=63 // pred_region
              %s506 = ssub.s32 256, 1
              %s507 = sshrl.u32 %s493, 1
              // While loop
              $region73: #{judge_emb_forward.1} parent=71 // loop_pre_header
                _
              $region74: #{judge_emb_forward.1} parent=71 // loop_header
                %s509 = sphi 0, %s511
                %p510 = scmp.ge.s32.totalorder %s509, %s507
                %s514 = sphi 0, %s523
                %s515 = sphi %s486, %s526
                %s516 = sphi %s497, %s527
              $region75: #{judge_emb_forward.1} parent=71 // loop_header_branch
                %513 = sbr.rel (%p510) target = $region79
              $region76: #{judge_emb_forward.1} parent=71 // loop_body
                %v517 = vld [vmem:[%s515] sm:%s506]
                %518 = vst [vmem:[%s516] sm:%s506] %v517
                %v519 = vld [vmem:[%s515 + $0x8] sm:%s506]
                %520 = vst [vmem:[%s516 + $0x8] sm:%s506] %v519
                %s521 = sadd.s32 1, %s514
                %p522 = scmp.ge.s32.totalorder %s521, %s507
                %s523 = scalar_select %p522, 0, %s521
                %s524 = smul.u32 %s523, 16
                %s525 = smul.u32 %s523, 16
                %s526 = scalar_lea.vmem %s486, %s524 [#allocation6]
                %s527 = scalar_lea.vmem %s497, %s525
              $region77: #{judge_emb_forward.1} parent=71 // loop_footer
                %s511 = sadd.s32 %s509, 1
              $region78: #{judge_emb_forward.1} parent=71 // loop_footer_branch
                %508 = sbr.rel target = $region74
              $region79: #{judge_emb_forward.1} parent=71 // loop_exit
                _
              %s528 = sshrl.u32 %s493, 1
              %s529 = sand.u32 %s493, 1
              %s530 = smul.u32 %s528, 2
              %s531 = smul.u32 8, %s530
              %s532 = scalar_lea.vmem %s486, %s531 [#allocation6]
              %s533 = smul.u32 8, %s530
              %s534 = scalar_lea.vmem %s497, %s533
              // While loop
              $region80: #{judge_emb_forward.1} parent=71 // loop_pre_header
                _
              $region81: #{judge_emb_forward.1} parent=71 // loop_header
                %s536 = sphi 0, %s538
                %p537 = scmp.ge.s32.totalorder %s536, %s529
                %s541 = sphi 0, %s548
                %s542 = sphi %s532, %s551
                %s543 = sphi %s534, %s552
              $region82: #{judge_emb_forward.1} parent=71 // loop_header_branch
                %540 = sbr.rel (%p537) target = $region86
              $region83: #{judge_emb_forward.1} parent=71 // loop_body
                %v544 = vld [vmem:[%s542] sm:%s506]
                %545 = vst [vmem:[%s543] sm:%s506] %v544
                %s546 = sadd.s32 1, %s541
                %p547 = scmp.ge.s32.totalorder %s546, %s529
                %s548 = scalar_select %p547, 0, %s546
                %s549 = smul.u32 %s548, 8
                %s550 = smul.u32 %s548, 8
                %s551 = scalar_lea.vmem %s532, %s549 [#allocation6]
                %s552 = scalar_lea.vmem %s534, %s550
              $region84: #{judge_emb_forward.1} parent=71 // loop_footer
                %s538 = sadd.s32 %s536, 1
              $region85: #{judge_emb_forward.1} parent=71 // loop_footer_branch
                %535 = sbr.rel target = $region81
              $region86: #{judge_emb_forward.1} parent=71 // loop_exit
                _
            $region72: #{judge_emb_forward.1} parent=63 // pred_fallthru
              _
          $region64: #{judge_emb_forward.1} parent=59 // pred_fallthru
            _
          %603 = vnop
        $region60: #{judge_emb_forward.1} parent=47 // pred_fallthru
          _
      $region48: #{judge_emb_forward.1} parent=5 // pred_fallthru
        _
      %p604 = scmp.le.s32.totalorder 2, %s15
      // Predicated region
      $region109: #{judge_emb_forward.1} parent=5 // pred_check
        %p605 = pneg %p604
      $region110: #{judge_emb_forward.1} parent=5 // pred_check_branch
        %607 = sbr.rel (%p605) target = $region112
      $region111: #{judge_emb_forward.1} parent=5 // pred_region
        %s608 = ssub.s32 %s15, 2
        // Predicated region
        $region113: #{judge_emb_forward.1} parent=111 // pred_check
          %p609 = pneg %p196
        $region114: #{judge_emb_forward.1} parent=111 // pred_check_branch
          %611 = sbr.rel (%p609) target = $region116
        $region115: #{judge_emb_forward.1} parent=111 // pred_region
          %s612 = sand.u32 %s181, 1
          %s613 = sand.u32 %s181, 1
          %s614 = smul.addr %s613, 16
          %s615 = scalar_lea.vmem [#allocation6], %s614
        $region116: #{judge_emb_forward.1} parent=111 // pred_fallthru
          _
      $region112: #{judge_emb_forward.1} parent=5 // pred_fallthru
        _
    $region6: #{judge_emb_forward.1} parent=1 // loop_footer
      %s19 = sadd.s32 1, %s15
    $region7: #{judge_emb_forward.1} parent=1 // loop_footer_branch
      %14 = sbr.rel target = $region3
    $region8: #{judge_emb_forward.1} parent=1 // loop_exit
      _
    %616 = vsyncpa [#allocation3], 1
    %s617 = scalar_lea.sflag [#allocation3], 1
    %618 = vsyncpa %s617, 1
    %619 = vsyncpa [#allocation5], 1

</llo_original>
